<compile_context>
chip_gen: v7x
topology: tpu7x:2x2x1
jax: 0.10.0
libtpu: 0.0.40
codegen_flags: <defaults>
</compile_context>

<pallas_src>
import jax
import jax.numpy as jnp
from jax import lax
from jax.experimental import pallas as pl
from jax.experimental.pallas import tpu as pltpu

LANE = 128
SUBLANE = 8


def _round_up(x, m):
    return (x + m - 1) // m * m


# ----------------------------------------------------------------------------
# Kernel
# ----------------------------------------------------------------------------
def _make_fcnet_kernel(num_layers):
    """Fused MLP kernel: per layer h = h @ W + b, ReLU on all but the last.

    Ref order: x, then (w_0, b_0), ..., (w_{L-1}, b_{L-1}), out.
    Matmuls run in the weights' dtype (bf16 or f32) with f32 accumulation.
    """

    def kernel(*refs):
        x_ref = refs[0]
        o_ref = refs[-1]
        h = x_ref[...]
        for i in range(num_layers):
            w = refs[1 + 2 * i][...]
            b = refs[2 + 2 * i][...]          # f32 (1, p_out)
            acc = jnp.dot(h, w, preferred_element_type=jnp.float32) + b
            if i < num_layers - 1:
                acc = jnp.maximum(acc, 0.0)
                h = acc.astype(w.dtype)       # back to compute dtype for next MXU pass
            else:
                h = acc
        o_ref[...] = h.astype(o_ref.dtype)

    return kernel


# ----------------------------------------------------------------------------
# One-time parameter preprocessing (BN + bias folding, padding, dtype cast)
# ----------------------------------------------------------------------------
def prepare_fcnet_params(layers, *, if_bn, compute_dtype=jnp.bfloat16):
    """One-time preprocessing (do NOT call per forward).

    * Folds eval-mode BatchNorm — applied twice per block, before AND after
      ReLU, exactly as in the PyTorch module — plus the Linear bias into
      per-layer (W_eff, b_eff):
        pre-ReLU  BN of layer i  -> column-scales W_i, rescales/shifts b_i
        post-ReLU BN of layer i  -> row-scales W_{i+1}, shifts b_{i+1}
      so the kernel is pure matmul + bias + ReLU.
    * Zero-pads every feature dim up to a multiple of 128 (lane-dense tiles,
      padded channels stay exactly zero).
    * Casts weights to `compute_dtype` (bf16 default: MXU-native, half the
      resident VMEM / HBM weight bytes).  Biases stay f32 (added to the f32
      accumulator).
    """
    num_layers = len(layers)
    folded = []
    prev_s = prev_t = None
    for i, layer in enumerate(layers):
        w = layer["w"].astype(jnp.float32)
        b = layer["b"].astype(jnp.float32)
        is_block = i < num_layers - 1
        if is_block and if_bn:
            inv_std = lax.rsqrt(layer["var"] + layer["eps"])
            s = layer["gamma"] * inv_std
            t = layer["beta"] - layer["mean"] * s
        else:
            s = t = None
        # Post-ReLU BN of the *previous* block folds into this layer's input side.
        if prev_s is not None:
            b = prev_t @ w + b                # uses the un-scaled W
            w = prev_s[:, None] * w
        # Pre-ReLU BN of *this* block folds into this layer's output side.
        if s is not None:
            w = w * s[None, :]
            b = b * s + t
        folded.append((w, b))
        prev_s, prev_t = s, t

    dims = [layers[0]["w"].shape[0]] + [l["w"].shape[1] for l in layers]
    p_dims = [_round_up(d, LANE) for d in dims]

    weights, biases = [], []
    for i, (w, b) in enumerate(folded):
        p_in, p_out = p_dims[i], p_dims[i + 1]
        wp = jnp.zeros((p_in, p_out), jnp.float32).at[: w.shape[0], : w.shape[1]].set(w)
        bp = jnp.zeros((1, p_out), jnp.float32).at[:, : b.shape[0]].set(b[None, :])
        weights.append(wp.astype(compute_dtype))
        biases.append(bp)

    return {
        "weights": weights,
        "biases": biases,
        "dims": dims,
        "p_dims": p_dims,
        "compute_dtype": compute_dtype,
    }


# ----------------------------------------------------------------------------
# Forward
# ----------------------------------------------------------------------------
def fcnet_forward_pallas(x, prepared, *, tm_max=256):
    """Runs the whole FCNet forward in one pallas_call.

    x:        [B, feature_channel] float32
    prepared: output of prepare_fcnet_params (built once per model).
    """
    weights, biases = prepared["weights"], prepared["biases"]
    dims, p_dims = prepared["dims"], prepared["p_dims"]
    compute_dtype = prepared["compute_dtype"]
    num_layers = len(weights)

    B, f_in = x.shape
    assert f_in == dims[0], "input feature dim mismatch"

    # Batch tile: fill the MXU (up to 256 rows on v6e/v7x) but collapse tiny
    # batches to a single grid step; always a multiple of 8 sublanes.
    tm = max(SUBLANE, min(_round_up(tm_max, SUBLANE), _round_up(B, SUBLANE)))
    Bp = _round_up(B, tm)

    # Per-call work on the input only: zero-pad batch/lanes, cast to compute dtype.
    xp = jnp.zeros((Bp, p_dims[0]), compute_dtype).at[:B, :f_in].set(
        x.astype(compute_dtype))

    args = [xp]
    in_specs = [pl.BlockSpec((tm, p_dims[0]), lambda i: (i, 0))]
    for li in range(num_layers):
        p_in, p_out = p_dims[li], p_dims[li + 1]
        args.extend([weights[li], biases[li]])
        # Constant index_map => parameters stay resident in VMEM across tiles.
        in_specs.extend([
            pl.BlockSpec((p_in, p_out), lambda i: (0, 0)),
            pl.BlockSpec((1, p_out), lambda i: (0, 0)),
        ])

    out_p = p_dims[-1]

    # Explicit VMEM budget: resident params (double-buffered by Pallas) +
    # double-buffered input/output tiles + activation headroom.
    param_bytes = sum(int(a.size) * a.dtype.itemsize for a in args[1:])
    io_bytes = (xp.dtype.itemsize * tm * p_dims[0] + 4 * tm * out_p) * 2
    act_bytes = 4 * tm * max(p_dims) * 2
    vmem_limit = int(min(64 * 1024 * 1024,
                         max(16 * 1024 * 1024,
                             2 * param_bytes + io_bytes + act_bytes + (4 << 20))))

    out_padded = pl.pallas_call(
        _make_fcnet_kernel(num_layers),
        out_shape=jax.ShapeDtypeStruct((Bp, out_p), jnp.float32),
        grid=(Bp // tm,),
        in_specs=in_specs,
        out_specs=pl.BlockSpec((tm, out_p), lambda i: (i, 0)),
        compiler_params=pltpu.CompilerParams(
            dimension_semantics=("parallel",),
            vmem_limit_bytes=vmem_limit),
    )(*args)

    return out_padded[:B, :dims[-1]]


# ----------------------------------------------------------------------------
# Parameter construction + pure-JAX reference
# ----------------------------------------------------------------------------
def init_linear(key, in_dim, out_dim):
    """Torch-like Linear init: uniform(-1/sqrt(in), 1/sqrt(in)); W stored [in,out]."""
    kw, kb = jax.random.split(key)
    bound = 1.0 / jnp.sqrt(jnp.float32(in_dim))
    w = jax.random.uniform(kw, (in_dim, out_dim), jnp.float32, -bound, bound)
    b = jax.random.uniform(kb, (out_dim,), jnp.float32, -bound, bound)
    return w, b


def init_block(key, in_dim, out_dim, if_bn):
    kl, kg, kbb, km, kv = jax.random.split(key, 5)
    w, b = init_linear(kl, in_dim, out_dim)
    layer = {"w": w, "b": b}
    if if_bn:
        layer["gamma"] = jax.random.uniform(kg, (out_dim,), jnp.float32, 0.8, 1.2)
        layer["beta"] = 0.1 * jax.random.normal(kbb, (out_dim,), jnp.float32)
        layer["mean"] = 0.1 * jax.random.normal(km, (out_dim,), jnp.float32)
        layer["var"] = jax.random.uniform(kv, (out_dim,), jnp.float32, 0.5, 1.5)
        layer["eps"] = jnp.float32(1e-5)
    return layer


def reference_forward(x, layers, if_bn):
    """Pure-JAX f32 reference mirroring FCNet.forward (eval mode)."""
    h = x
    num_layers = len(layers)
    for i, layer in enumerate(layers):
        h = h @ layer["w"] + layer["b"]
        is_block = i < num_layers - 1
        if is_block:
            if if_bn:
                scale = layer["gamma"] * lax.rsqrt(layer["var"] + layer["eps"])
                shift = layer["beta"] - layer["mean"] * scale
                h = h * scale + shift
            h = jnp.maximum(h, 0.0)
            if if_bn:
                h = h * scale + shift   # bn1 applied twice, as in the module
            # dropout: identity in eval mode
    return h


if __name__ == "__main__":
    # Small shapes consistent with FCNet(feature_channel, output_channel,
    # hidden_number, hidden_size, if_bn=True, if_dp=True), run in eval mode.
    batch = 64
    feature_channel = 16
    output_channel = 8
    hidden_number = 2
    hidden_size = 64
    if_bn = True
    # if_dp=True -> Dropout is identity at inference.

    key = jax.random.PRNGKey(0)
    k_x, k_first, k_last, *k_mid = jax.random.split(key, 3 + hidden_number)

    x = jax.random.normal(k_x, (batch, feature_channel), jnp.float32)

    layers = [init_block(k_first, feature_channel, hidden_size, if_bn)]
    for i in range(hidden_number):
        layers.append(init_block(k_mid[i], hidden_size, hidden_size, if_bn))
    w_last, b_last = init_linear(k_last, hidden_size, output_channel)
    layers.append({"w": w_last, "b": b_last})  # last_layer: plain Linear

    ref = reference_forward(x, layers, if_bn)

    # --- main (bf16 MXU) path: params prepared ONCE, reused per forward -----
    prepared_bf16 = prepare_fcnet_params(layers, if_bn=if_bn,
                                         compute_dtype=jnp.bfloat16)
    out_bf16 = jax.block_until_ready(fcnet_forward_pallas(x, prepared_bf16))
    assert out_bf16.shape == (batch, output_channel)
    assert jnp.allclose(out_bf16, ref, atol=5e-2, rtol=5e-2), \
        "bf16 kernel mismatch vs reference"

    # --- f32 path validates exact BN/bias folding against tight tolerance ---
    prepared_f32 = prepare_fcnet_params(layers, if_bn=if_bn,
                                        compute_dtype=jnp.float32)
    out_f32 = jax.block_until_ready(fcnet_forward_pallas(x, prepared_f32))
    assert jnp.allclose(out_f32, ref, atol=1e-3, rtol=1e-3), \
        "f32 kernel mismatch vs reference"

    print("KERNEL_OK")
</pallas_src>

<mosaic_0001>
module attributes {stable_mosaic.version = 11 : i64} {
  func.func @kernel(%arg0: i32, %arg1: memref<64x128xbf16, #tpu.memory_space<vmem>>, %arg2: memref<128x128xbf16, #tpu.memory_space<vmem>>, %arg3: memref<1x128xf32, #tpu.memory_space<vmem>>, %arg4: memref<128x128xbf16, #tpu.memory_space<vmem>>, %arg5: memref<1x128xf32, #tpu.memory_space<vmem>>, %arg6: memref<128x128xbf16, #tpu.memory_space<vmem>>, %arg7: memref<1x128xf32, #tpu.memory_space<vmem>>, %arg8: memref<128x128xbf16, #tpu.memory_space<vmem>>, %arg9: memref<1x128xf32, #tpu.memory_space<vmem>>, %arg10: memref<64x128xf32, #tpu.memory_space<vmem>>) attributes {dimension_semantics = [#tpu.dimension_semantics<parallel>], iteration_bounds = array<i64: 1>, scalar_prefetch = 0 : i64, scratch_operands = 0 : i64, tpu.core_type = #tpu.core_type<tc>, window_params = [{transform_indices = @transform_0, window_bounds = array<i64: 64, 128>}, {pipeline_mode = #tpu.pipeline_mode<synchronous>, transform_indices = @transform_1, window_bounds = array<i64: 128, 128>}, {pipeline_mode = #tpu.pipeline_mode<synchronous>, transform_indices = @transform_2, window_bounds = array<i64: 1, 128>}, {pipeline_mode = #tpu.pipeline_mode<synchronous>, transform_indices = @transform_3, window_bounds = array<i64: 128, 128>}, {pipeline_mode = #tpu.pipeline_mode<synchronous>, transform_indices = @transform_4, window_bounds = array<i64: 1, 128>}, {pipeline_mode = #tpu.pipeline_mode<synchronous>, transform_indices = @transform_5, window_bounds = array<i64: 128, 128>}, {pipeline_mode = #tpu.pipeline_mode<synchronous>, transform_indices = @transform_6, window_bounds = array<i64: 1, 128>}, {pipeline_mode = #tpu.pipeline_mode<synchronous>, transform_indices = @transform_7, window_bounds = array<i64: 128, 128>}, {pipeline_mode = #tpu.pipeline_mode<synchronous>, transform_indices = @transform_8, window_bounds = array<i64: 1, 128>}, {transform_indices = @transform_9, window_bounds = array<i64: 64, 128>}]} {
    %c0 = arith.constant 0 : index
    %c0_0 = arith.constant 0 : index
    %0 = vector.load %arg1[%c0, %c0_0] : memref<64x128xbf16, #tpu.memory_space<vmem>>, vector<64x128xbf16>
    %c0_1 = arith.constant 0 : index
    %c0_2 = arith.constant 0 : index
    %1 = vector.load %arg2[%c0_1, %c0_2] : memref<128x128xbf16, #tpu.memory_space<vmem>>, vector<128x128xbf16>
    %c0_3 = arith.constant 0 : index
    %c0_4 = arith.constant 0 : index
    %2 = vector.load %arg3[%c0_3, %c0_4] : memref<1x128xf32, #tpu.memory_space<vmem>>, vector<1x128xf32>
    %cst = arith.constant dense<0.000000e+00> : vector<64x128xf32>
    %3 = tpu.matmul %0, %1, %cst {dimension_numbers = #tpu.dot_dimension_numbers<[1], [0], [0], [1], [0, 0, 1, 1], [], []>} : vector<64x128xbf16>, vector<128x128xbf16>, vector<64x128xf32> -> vector<64x128xf32>
    %4 = vector.broadcast %2 : vector<1x128xf32> to vector<64x128xf32>
    %5 = arith.addf %3, %4 : vector<64x128xf32>
    %cst_5 = arith.constant 0.000000e+00 : f32
    %6 = vector.broadcast %cst_5 : f32 to vector<64x128xf32>
    %7 = arith.maximumf %5, %6 : vector<64x128xf32>
    %8 = arith.truncf %7 : vector<64x128xf32> to vector<64x128xbf16>
    %c0_6 = arith.constant 0 : index
    %c0_7 = arith.constant 0 : index
    %9 = vector.load %arg4[%c0_6, %c0_7] : memref<128x128xbf16, #tpu.memory_space<vmem>>, vector<128x128xbf16>
    %c0_8 = arith.constant 0 : index
    %c0_9 = arith.constant 0 : index
    %10 = vector.load %arg5[%c0_8, %c0_9] : memref<1x128xf32, #tpu.memory_space<vmem>>, vector<1x128xf32>
    %cst_10 = arith.constant dense<0.000000e+00> : vector<64x128xf32>
    %11 = tpu.matmul %8, %9, %cst_10 {dimension_numbers = #tpu.dot_dimension_numbers<[1], [0], [0], [1], [0, 0, 1, 1], [], []>} : vector<64x128xbf16>, vector<128x128xbf16>, vector<64x128xf32> -> vector<64x128xf32>
    %12 = vector.broadcast %10 : vector<1x128xf32> to vector<64x128xf32>
    %13 = arith.addf %11, %12 : vector<64x128xf32>
    %cst_11 = arith.constant 0.000000e+00 : f32
    %14 = vector.broadcast %cst_11 : f32 to vector<64x128xf32>
    %15 = arith.maximumf %13, %14 : vector<64x128xf32>
    %16 = arith.truncf %15 : vector<64x128xf32> to vector<64x128xbf16>
    %c0_12 = arith.constant 0 : index
    %c0_13 = arith.constant 0 : index
    %17 = vector.load %arg6[%c0_12, %c0_13] : memref<128x128xbf16, #tpu.memory_space<vmem>>, vector<128x128xbf16>
    %c0_14 = arith.constant 0 : index
    %c0_15 = arith.constant 0 : index
    %18 = vector.load %arg7[%c0_14, %c0_15] : memref<1x128xf32, #tpu.memory_space<vmem>>, vector<1x128xf32>
    %cst_16 = arith.constant dense<0.000000e+00> : vector<64x128xf32>
    %19 = tpu.matmul %16, %17, %cst_16 {dimension_numbers = #tpu.dot_dimension_numbers<[1], [0], [0], [1], [0, 0, 1, 1], [], []>} : vector<64x128xbf16>, vector<128x128xbf16>, vector<64x128xf32> -> vector<64x128xf32>
    %20 = vector.broadcast %18 : vector<1x128xf32> to vector<64x128xf32>
    %21 = arith.addf %19, %20 : vector<64x128xf32>
    %cst_17 = arith.constant 0.000000e+00 : f32
    %22 = vector.broadcast %cst_17 : f32 to vector<64x128xf32>
    %23 = arith.maximumf %21, %22 : vector<64x128xf32>
    %24 = arith.truncf %23 : vector<64x128xf32> to vector<64x128xbf16>
    %c0_18 = arith.constant 0 : index
    %c0_19 = arith.constant 0 : index
    %25 = vector.load %arg8[%c0_18, %c0_19] : memref<128x128xbf16, #tpu.memory_space<vmem>>, vector<128x128xbf16>
    %c0_20 = arith.constant 0 : index
    %c0_21 = arith.constant 0 : index
    %26 = vector.load %arg9[%c0_20, %c0_21] : memref<1x128xf32, #tpu.memory_space<vmem>>, vector<1x128xf32>
    %cst_22 = arith.constant dense<0.000000e+00> : vector<64x128xf32>
    %27 = tpu.matmul %24, %25, %cst_22 {dimension_numbers = #tpu.dot_dimension_numbers<[1], [0], [0], [1], [0, 0, 1, 1], [], []>} : vector<64x128xbf16>, vector<128x128xbf16>, vector<64x128xf32> -> vector<64x128xf32>
    %28 = vector.broadcast %26 : vector<1x128xf32> to vector<64x128xf32>
    %29 = arith.addf %27, %28 : vector<64x128xf32>
    %c0_23 = arith.constant 0 : index
    %c0_24 = arith.constant 0 : index
    %30 = vector.load %arg10[%c0_23, %c0_24] : memref<64x128xf32, #tpu.memory_space<vmem>>, vector<64x128xf32>
    tpu.vector_store %arg10[%c0_23, %c0_24], %29 {strides = array<i32>} : memref<64x128xf32, #tpu.memory_space<vmem>>, vector<64x128xf32>,
    return
  }
  func.func @transform_0(%arg0: i32) -> (i32, i32) {
    %c0_i32 = arith.constant 0 : i32
    %c0_i32_0 = arith.constant 0 : i32
    return %arg0, %c0_i32 : i32, i32
  }
  func.func @transform_1(%arg0: i32) -> (i32, i32) {
    %c0_i32 = arith.constant 0 : i32
    %c0_i32_0 = arith.constant 0 : i32
    %c0_i32_1 = arith.constant 0 : i32
    return %c0_i32, %c0_i32_0 : i32, i32
  }
  func.func @transform_2(%arg0: i32) -> (i32, i32) {
    %c0_i32 = arith.constant 0 : i32
    %c0_i32_0 = arith.constant 0 : i32
    %c0_i32_1 = arith.constant 0 : i32
    return %c0_i32, %c0_i32_0 : i32, i32
  }
  func.func @transform_3(%arg0: i32) -> (i32, i32) {
    %c0_i32 = arith.constant 0 : i32
    %c0_i32_0 = arith.constant 0 : i32
    %c0_i32_1 = arith.constant 0 : i32
    return %c0_i32, %c0_i32_0 : i32, i32
  }
  func.func @transform_4(%arg0: i32) -> (i32, i32) {
    %c0_i32 = arith.constant 0 : i32
    %c0_i32_0 = arith.constant 0 : i32
    %c0_i32_1 = arith.constant 0 : i32
    return %c0_i32, %c0_i32_0 : i32, i32
  }
  func.func @transform_5(%arg0: i32) -> (i32, i32) {
    %c0_i32 = arith.constant 0 : i32
    %c0_i32_0 = arith.constant 0 : i32
    %c0_i32_1 = arith.constant 0 : i32
    return %c0_i32, %c0_i32_0 : i32, i32
  }
  func.func @transform_6(%arg0: i32) -> (i32, i32) {
    %c0_i32 = arith.constant 0 : i32
    %c0_i32_0 = arith.constant 0 : i32
    %c0_i32_1 = arith.constant 0 : i32
    return %c0_i32, %c0_i32_0 : i32, i32
  }
  func.func @transform_7(%arg0: i32) -> (i32, i32) {
    %c0_i32 = arith.constant 0 : i32
    %c0_i32_0 = arith.constant 0 : i32
    %c0_i32_1 = arith.constant 0 : i32
    return %c0_i32, %c0_i32_0 : i32, i32
  }
  func.func @transform_8(%arg0: i32) -> (i32, i32) {
    %c0_i32 = arith.constant 0 : i32
    %c0_i32_0 = arith.constant 0 : i32
    %c0_i32_1 = arith.constant 0 : i32
    return %c0_i32, %c0_i32_0 : i32, i32
  }
  func.func @transform_9(%arg0: i32) -> (i32, i32) {
    %c0_i32 = arith.constant 0 : i32
    %c0_i32_0 = arith.constant 0 : i32
    return %arg0, %c0_i32 : i32, i32
  }
}

</mosaic_0001>

<llo_original>
// kernel: tpu_custom_call.1
$region0: #{tpu_custom_call.1}
  #allocation0 [shape = 'u32[]', space=smem, size = 0x4, offset = 0x4, fixed_abs, tag = 'smem constant byte address 0x4 - core index']
  #allocation1 [shape = 'u32[144,128]{1,0:T(1,128)}', space=vmem, size = 0x12000, scoped, tag = 'internal scratch']
  %s0 = inlined_call_operand.hbm [shape: bf16[64,128], index: 0, kind: input, shape index: {}]
  %s1 = inlined_call_operand.hbm [shape: bf16[128,128], index: 1, kind: input, shape index: {}]
  %s2 = inlined_call_operand.vmem [shape: f32[1,128], index: 2, kind: input, shape index: {}]
  %s3 = inlined_call_operand.hbm [shape: bf16[128,128], index: 3, kind: input, shape index: {}]
  %s4 = inlined_call_operand.vmem [shape: f32[1,128], index: 4, kind: input, shape index: {}]
  %s5 = inlined_call_operand.hbm [shape: bf16[128,128], index: 5, kind: input, shape index: {}]
  %s6 = inlined_call_operand.vmem [shape: f32[1,128], index: 6, kind: input, shape index: {}]
  %s7 = inlined_call_operand.hbm [shape: bf16[128,128], index: 7, kind: input, shape index: {}]
  %s8 = inlined_call_operand.vmem [shape: f32[1,128], index: 8, kind: input, shape index: {}]
  %s9 = inlined_call_operand.hbm [shape: f32[64,128], index: 9, kind: output, shape index: {}]
  %s10 = sld [smem:[#allocation0]]
  $region66: #{tpu_custom_call.1} parent=0
    _
  %s12 = ssub.s32 1, %s10
  %s13 = scalar_select 0, %s12, %s10
  $region1: #{tpu_custom_call.1} parent=0
    #allocation2 [shape = 'u8[16384]{0}', space=vmem, size = 0x4000, scoped, tag = 'input window, operand 0, single buffered']
    #allocation3 [shape = 's32[1]{0}', space=sflag, size = 0x4, scoped, tag = 'scoped memory for tpu_custom_call.1']
    #allocation4 [shape = 's32[1]{0}', space=sflag, size = 0x4, scoped, tag = 'scoped memory for tpu_custom_call.1']
    #allocation5 [shape = 'u8[32768]{0}', space=vmem, size = 0x8000, scoped, tag = 'input window, operand 1, single buffered']
    #allocation6 [shape = 's32[1]{0}', space=sflag, size = 0x4, scoped, tag = 'scoped memory for tpu_custom_call.1']
    #allocation7 [shape = 'u8[32768]{0}', space=vmem, size = 0x8000, scoped, tag = 'input window, operand 3, single buffered']
    #allocation8 [shape = 'u8[32768]{0}', space=vmem, size = 0x8000, scoped, tag = 'input window, operand 5, single buffered']
    #allocation9 [shape = 's32[1]{0}', space=sflag, size = 0x4, scoped, tag = 'scoped memory for tpu_custom_call.1']
    #allocation10 [shape = 'u8[32768]{0}', space=vmem, size = 0x8000, scoped, tag = 'input window, operand 7, single buffered']
    #allocation11 [shape = 'u8[32768]{0}', space=vmem, size = 0x8000, scoped, tag = 'output window, operand 0, single buffered']
    %14 = vsyncpa [#allocation3], 0
    %15 = vsyncpa [#allocation6], 0
    %16 = vsyncpa [#allocation9], 0
    %17 = vsyncpa [#allocation4], 0
    // Predicated region
    $region2: #{tpu_custom_call.1} parent=1 // pred_check
      _
    $region3: #{tpu_custom_call.1} parent=1 // pred_check_branch
      %19 = sbr.rel (0) target = $region5
    $region4: #{tpu_custom_call.1} parent=1 // pred_region
      %s21 = ssub.s32 512, 512
      %22 = vsyncadd [#allocation3], %s21
      %s23 = sshll.u32 [#allocation2], 4
      %s24 = int_to_ptr.vmem [resolvable:$true] %s23
      %29 = dma.hbm_to_vmem [thread:$0]  %s0, 512, %s24, [#allocation3], 64, 64, 4
    $region5: #{tpu_custom_call.1} parent=1 // pred_fallthru
      _
    // Predicated region
    $region6: #{tpu_custom_call.1} parent=1 // pred_check
      _
    $region7: #{tpu_custom_call.1} parent=1 // pred_check_branch
      %31 = sbr.rel (0) target = $region9
    $region8: #{tpu_custom_call.1} parent=1 // pred_region
      %s33 = ssub.s32 1024, 1024
      %34 = vsyncadd [#allocation6], %s33
      %s35 = sshll.u32 [#allocation5], 4
      %s36 = int_to_ptr.vmem [resolvable:$true] %s35
      %41 = dma.hbm_to_vmem [thread:$0]  %s1, 1024, %s36, [#allocation6], 64, 64, 4
    $region9: #{tpu_custom_call.1} parent=1 // pred_fallthru
      _
    // Predicated region
    $region10: #{tpu_custom_call.1} parent=1 // pred_check
      _
    $region11: #{tpu_custom_call.1} parent=1 // pred_check_branch
      %43 = sbr.rel (0) target = $region13
    $region12: #{tpu_custom_call.1} parent=1 // pred_region
      _
    $region13: #{tpu_custom_call.1} parent=1 // pred_fallthru
      _
    // Predicated region
    $region14: #{tpu_custom_call.1} parent=1 // pred_check
      _
    $region15: #{tpu_custom_call.1} parent=1 // pred_check_branch
      %45 = sbr.rel (0) target = $region17
    $region16: #{tpu_custom_call.1} parent=1 // pred_region
      %s47 = ssub.s32 1024, 1024
      %48 = vsyncadd [#allocation6], %s47
      %s49 = sshll.u32 [#allocation7], 4
      %s50 = int_to_ptr.vmem [resolvable:$true] %s49
      %55 = dma.hbm_to_vmem [thread:$0]  %s3, 1024, %s50, [#allocation6], 64, 64, 4
    $region17: #{tpu_custom_call.1} parent=1 // pred_fallthru
      _
    // Predicated region
    $region18: #{tpu_custom_call.1} parent=1 // pred_check
      _
    $region19: #{tpu_custom_call.1} parent=1 // pred_check_branch
      %57 = sbr.rel (0) target = $region21
    $region20: #{tpu_custom_call.1} parent=1 // pred_region
      _
    $region21: #{tpu_custom_call.1} parent=1 // pred_fallthru
      _
    // Predicated region
    $region22: #{tpu_custom_call.1} parent=1 // pred_check
      _
    $region23: #{tpu_custom_call.1} parent=1 // pred_check_branch
      %59 = sbr.rel (0) target = $region25
    $region24: #{tpu_custom_call.1} parent=1 // pred_region
      %s61 = ssub.s32 1024, 1024
      %62 = vsyncadd [#allocation9], %s61
      %s63 = sshll.u32 [#allocation8], 4
      %s64 = int_to_ptr.vmem [resolvable:$true] %s63
      %69 = dma.hbm_to_vmem [thread:$0]  %s5, 1024, %s64, [#allocation9], 64, 64, 4
    $region25: #{tpu_custom_call.1} parent=1 // pred_fallthru
      _
    // Predicated region
    $region26: #{tpu_custom_call.1} parent=1 // pred_check
      _
    $region27: #{tpu_custom_call.1} parent=1 // pred_check_branch
      %71 = sbr.rel (0) target = $region29
    $region28: #{tpu_custom_call.1} parent=1 // pred_region
      _
    $region29: #{tpu_custom_call.1} parent=1 // pred_fallthru
      _
    // Predicated region
    $region30: #{tpu_custom_call.1} parent=1 // pred_check
      _
    $region31: #{tpu_custom_call.1} parent=1 // pred_check_branch
      %73 = sbr.rel (0) target = $region33
    $region32: #{tpu_custom_call.1} parent=1 // pred_region
      %s75 = ssub.s32 1024, 1024
      %76 = vsyncadd [#allocation9], %s75
      %s77 = sshll.u32 [#allocation10], 4
      %s78 = int_to_ptr.vmem [resolvable:$true] %s77
      %83 = dma.hbm_to_vmem [thread:$0]  %s7, 1024, %s78, [#allocation9], 64, 64, 4
    $region33: #{tpu_custom_call.1} parent=1 // pred_fallthru
      _
    // Predicated region
    $region34: #{tpu_custom_call.1} parent=1 // pred_check
      _
    $region35: #{tpu_custom_call.1} parent=1 // pred_check_branch
      %85 = sbr.rel (0) target = $region37
    $region36: #{tpu_custom_call.1} parent=1 // pred_region
      _
    $region37: #{tpu_custom_call.1} parent=1 // pred_fallthru
      _
    // Predicated region
    $region38: #{tpu_custom_call.1} parent=1 // pred_check
      _
    $region39: #{tpu_custom_call.1} parent=1 // pred_check_branch
      %87 = sbr.rel (0) target = $region41
    $region40: #{tpu_custom_call.1} parent=1 // pred_region
      %88 = dma.done [#allocation3], 512
    $region41: #{tpu_custom_call.1} parent=1 // pred_fallthru
      _
    // Predicated region
    $region42: #{tpu_custom_call.1} parent=1 // pred_check
      _
    $region43: #{tpu_custom_call.1} parent=1 // pred_check_branch
      %90 = sbr.rel (0) target = $region45
    $region44: #{tpu_custom_call.1} parent=1 // pred_region
      %91 = dma.done [#allocation6], 1024
    $region45: #{tpu_custom_call.1} parent=1 // pred_fallthru
      _
    // Predicated region
    $region46: #{tpu_custom_call.1} parent=1 // pred_check
      _
    $region47: #{tpu_custom_call.1} parent=1 // pred_check_branch
      %93 = sbr.rel (0) target = $region49
    $region48: #{tpu_custom_call.1} parent=1 // pred_region
      %94 = dma.done [#allocation6], 1024
    $region49: #{tpu_custom_call.1} parent=1 // pred_fallthru
      _
    // Predicated region
    $region50: #{tpu_custom_call.1} parent=1 // pred_check
      _
    $region51: #{tpu_custom_call.1} parent=1 // pred_check_branch
      %96 = sbr.rel (0) target = $region53
    $region52: #{tpu_custom_call.1} parent=1 // pred_region
      %97 = dma.done [#allocation9], 1024
    $region53: #{tpu_custom_call.1} parent=1 // pred_fallthru
      _
    // Predicated region
    $region54: #{tpu_custom_call.1} parent=1 // pred_check
      _
    $region55: #{tpu_custom_call.1} parent=1 // pred_check_branch
      %99 = sbr.rel (0) target = $region57
    $region56: #{tpu_custom_call.1} parent=1 // pred_region
      %100 = dma.done [#allocation9], 1024
    $region57: #{tpu_custom_call.1} parent=1 // pred_fallthru
      _
    %v102 = vld [vmem:[#allocation2] sm:$0xf]
    %v103 = vld [vmem:[#allocation2 + $0x4] sm:$0xf]
    %v104 = vld [vmem:[#allocation2 + $0x8] sm:$0xf]
    %v105 = vld [vmem:[#allocation2 + $0xc] sm:$0xf]
    %v106 = vld [vmem:[#allocation2 + $0x10] sm:$0xf]
    %v107 = vld [vmem:[#allocation2 + $0x14] sm:$0xf]
    %v108 = vld [vmem:[#allocation2 + $0x18] sm:$0xf]
    %v109 = vld [vmem:[#allocation2 + $0x1c] sm:$0xf]
    %v110 = vld [vmem:[#allocation5] sm:$0xf]
    %v111 = vld [vmem:[#allocation5 + $0x4] sm:$0xf]
    %v112 = vld [vmem:[#allocation5 + $0x8] sm:$0xf]
    %v113 = vld [vmem:[#allocation5 + $0xc] sm:$0xf]
    %v114 = vld [vmem:[#allocation5 + $0x10] sm:$0xf]
    %v115 = vld [vmem:[#allocation5 + $0x14] sm:$0xf]
    %v116 = vld [vmem:[#allocation5 + $0x18] sm:$0xf]
    %v117 = vld [vmem:[#allocation5 + $0x1c] sm:$0xf]
    %v118 = vld [vmem:[#allocation5 + $0x20] sm:$0xf]
    %v119 = vld [vmem:[#allocation5 + $0x24] sm:$0xf]
    %v120 = vld [vmem:[#allocation5 + $0x28] sm:$0xf]
    %v121 = vld [vmem:[#allocation5 + $0x2c] sm:$0xf]
    %v122 = vld [vmem:[#allocation5 + $0x30] sm:$0xf]
    %v123 = vld [vmem:[#allocation5 + $0x34] sm:$0xf]
    %v124 = vld [vmem:[#allocation5 + $0x38] sm:$0xf]
    %v125 = vld [vmem:[#allocation5 + $0x3c] sm:$0xf]
    %v126 = vld [vmem:[%s2] sm:$0x1]
    %v128 = vlaneseq
    %v129 = vshrl.u32 %v128, 7
    %v130 = vsub.s32 0, %v129
    %v131 = vrot.slane %v126, %v130
    %v141 = vunpack.c.l.b16 %v102
    %v142 = vunpack.c.l.b16 %v103
    %v143 = vunpack.c.l.b16 %v104
    %v144 = vunpack.c.l.b16 %v105
    %v145 = vunpack.c.l.b16 %v106
    %v146 = vunpack.c.l.b16 %v107
    %v147 = vunpack.c.l.b16 %v108
    %v148 = vunpack.c.l.b16 %v109
    %v149 = vpack.c.b16 %v142, %v141
    %v150 = vpack.c.b16 %v144, %v143
    %v151 = vpack.c.b16 %v146, %v145
    %v152 = vpack.c.b16 %v148, %v147
    %v173 = vunpack.c.l.b16 %v110
    %v174 = vunpack.c.l.b16 %v111
    %v175 = vunpack.c.l.b16 %v112
    %v176 = vunpack.c.l.b16 %v113
    %v177 = vunpack.c.l.b16 %v114
    %v178 = vunpack.c.l.b16 %v115
    %v179 = vunpack.c.l.b16 %v116
    %v180 = vunpack.c.l.b16 %v117
    %v181 = vunpack.c.l.b16 %v118
    %v182 = vunpack.c.l.b16 %v119
    %v183 = vunpack.c.l.b16 %v120
    %v184 = vunpack.c.l.b16 %v121
    %v185 = vunpack.c.l.b16 %v122
    %v186 = vunpack.c.l.b16 %v123
    %v187 = vunpack.c.l.b16 %v124
    %v188 = vunpack.c.l.b16 %v125
    %v189 = vpack.c.b16 %v174, %v173
    %v190 = vpack.c.b16 %v176, %v175
    %v191 = vpack.c.b16 %v178, %v177
    %v192 = vpack.c.b16 %v180, %v179
    %v193 = vpack.c.b16 %v182, %v181
    %v194 = vpack.c.b16 %v184, %v183
    %v195 = vpack.c.b16 %v186, %v185
    %v196 = vpack.c.b16 %v188, %v187
    %205 = vmatprep.subr.bf16.mxu0 0
    %206 = vmatpush1.bf16.msra.mxu0 %v189
    %207 = vmatprep.subr.bf16.mxu0 0
    %208 = vmatpush1.bf16.msra.mxu0 %v190
    %209 = vmatprep.subr.bf16.mxu0 0
    %210 = vmatpush1.bf16.msra.mxu0 %v191
    %211 = vmatprep.subr.bf16.mxu0 0
    %212 = vmatpush1.bf16.msra.mxu0 %v192
    %213 = vmatprep.subr.bf16.mxu0 0
    %214 = vmatpush1.bf16.msra.mxu0 %v193
    %215 = vmatprep.subr.bf16.mxu0 0
    %216 = vmatpush1.bf16.msra.mxu0 %v194
    %217 = vmatprep.subr.bf16.mxu0 0
    %218 = vmatpush1.bf16.msra.mxu0 %v195
    %219 = vmatprep.subr.bf16.mxu0 0
    %220 = vmatpush1.bf16.msra.mxu0 %v196
    %221 = vmatprep.subr.bf16.mxu0 0
    %222 = vmatpush1.bf16.msra.mxu0 0
    %223 = vmatprep.subr.bf16.mxu0 0
    %224 = vmatpush1.bf16.msra.mxu0 0
    %225 = vmatprep.subr.bf16.mxu0 0
    %226 = vmatpush1.bf16.msra.mxu0 0
    %227 = vmatprep.subr.bf16.mxu0 0
    %228 = vmatpush1.bf16.msra.mxu0 0
    %229 = vmatprep.subr.bf16.mxu0 0
    %230 = vmatpush1.bf16.msra.mxu0 0
    %231 = vmatprep.subr.bf16.mxu0 0
    %232 = vmatpush1.bf16.msra.mxu0 0
    %233 = vmatprep.subr.bf16.mxu0 0
    %234 = vmatpush1.bf16.msra.mxu0 0
    %235 = vmatprep.subr.bf16.mxu0 0
    %236 = vmatpush1.bf16.msra.mxu0 0
    %237 = vmatprep.mubr.bf16.mxu0 0
    %238 = vmatmul.mubr.bf16.gmra.mrb[0].mxu0 %v149
    %v239 = vpop.f32.mrb[0].mxu0
    %v240 = vadd.f32 %v131, %v239
    %v241 = vpop.f32.mrb[0].mxu0
    %v242 = vpop.f32.mrb[0].mxu0
    %v243 = vadd.f32 %v131, %v242
    %v244 = vpop.f32.mrb[0].mxu0
    %245 = vmatprep.mubr.bf16.mxu0 0
    %246 = vmatmul.mubr.bf16.gmra.mrb[0].mxu0 %v150
    %v247 = vpop.f32.mrb[0].mxu0
    %v248 = vadd.f32 %v131, %v247
    %v249 = vpop.f32.mrb[0].mxu0
    %v250 = vpop.f32.mrb[0].mxu0
    %v251 = vadd.f32 %v131, %v250
    %v252 = vpop.f32.mrb[0].mxu0
    %253 = vmatprep.mubr.bf16.mxu0 0
    %254 = vmatmul.mubr.bf16.gmra.mrb[0].mxu0 %v151
    %v255 = vpop.f32.mrb[0].mxu0
    %v256 = vadd.f32 %v131, %v255
    %v257 = vpop.f32.mrb[0].mxu0
    %v258 = vpop.f32.mrb[0].mxu0
    %v259 = vadd.f32 %v131, %v258
    %v260 = vpop.f32.mrb[0].mxu0
    %261 = vmatprep.mubr.bf16.mxu0 0
    %262 = vmatmul.mubr.bf16.gmra.mrb[0].mxu0 %v152
    %v263 = vpop.f32.mrb[0].mxu0
    %v264 = vadd.f32 %v131, %v263
    %v265 = vpop.f32.mrb[0].mxu0
    %v266 = vpop.f32.mrb[0].mxu0
    %v267 = vadd.f32 %v131, %v266
    %v268 = vpop.f32.mrb[0].mxu0
    %269 = vdwg.mxu0
    %v270 = vmax.f32 %v240, 0.0
    %v271 = vmax.f32 %v243, 0.0
    %v272 = vmax.f32 %v248, 0.0
    %v273 = vmax.f32 %v251, 0.0
    %v274 = vmax.f32 %v256, 0.0
    %v275 = vmax.f32 %v259, 0.0
    %v276 = vmax.f32 %v264, 0.0
    %v277 = vmax.f32 %v267, 0.0
    %v278 = vpack.c.bf16 %v271, %v270
    %v279 = vpack.c.bf16 %v273, %v272
    %v280 = vpack.c.bf16 %v275, %v274
    %v281 = vpack.c.bf16 %v277, %v276
    %v282 = vld [vmem:[#allocation7] sm:$0xf]
    %v283 = vld [vmem:[#allocation7 + $0x4] sm:$0xf]
    %v284 = vld [vmem:[#allocation7 + $0x8] sm:$0xf]
    %v285 = vld [vmem:[#allocation7 + $0xc] sm:$0xf]
    %v286 = vld [vmem:[#allocation7 + $0x10] sm:$0xf]
    %v287 = vld [vmem:[#allocation7 + $0x14] sm:$0xf]
    %v288 = vld [vmem:[#allocation7 + $0x18] sm:$0xf]
    %v289 = vld [vmem:[#allocation7 + $0x1c] sm:$0xf]
    %v290 = vld [vmem:[#allocation7 + $0x20] sm:$0xf]
    %v291 = vld [vmem:[#allocation7 + $0x24] sm:$0xf]
    %v292 = vld [vmem:[#allocation7 + $0x28] sm:$0xf]
    %v293 = vld [vmem:[#allocation7 + $0x2c] sm:$0xf]
    %v294 = vld [vmem:[#allocation7 + $0x30] sm:$0xf]
    %v295 = vld [vmem:[#allocation7 + $0x34] sm:$0xf]
    %v296 = vld [vmem:[#allocation7 + $0x38] sm:$0xf]
    %v297 = vld [vmem:[#allocation7 + $0x3c] sm:$0xf]
    %v298 = vld [vmem:[%s4] sm:$0x1]
    %v300 = vlaneseq
    %v301 = vshrl.u32 %v300, 7
    %v302 = vsub.s32 0, %v301
    %v303 = vrot.slane %v298, %v302
    %v321 = vunpack.c.l.b16 %v282
    %v322 = vunpack.c.l.b16 %v283
    %v323 = vunpack.c.l.b16 %v284
    %v324 = vunpack.c.l.b16 %v285
    %v325 = vunpack.c.l.b16 %v286
    %v326 = vunpack.c.l.b16 %v287
    %v327 = vunpack.c.l.b16 %v288
    %v328 = vunpack.c.l.b16 %v289
    %v329 = vunpack.c.l.b16 %v290
    %v330 = vunpack.c.l.b16 %v291
    %v331 = vunpack.c.l.b16 %v292
    %v332 = vunpack.c.l.b16 %v293
    %v333 = vunpack.c.l.b16 %v294
    %v334 = vunpack.c.l.b16 %v295
    %v335 = vunpack.c.l.b16 %v296
    %v336 = vunpack.c.l.b16 %v297
    %v337 = vpack.c.b16 %v322, %v321
    %v338 = vpack.c.b16 %v324, %v323
    %v339 = vpack.c.b16 %v326, %v325
    %v340 = vpack.c.b16 %v328, %v327
    %v341 = vpack.c.b16 %v330, %v329
    %v342 = vpack.c.b16 %v332, %v331
    %v343 = vpack.c.b16 %v334, %v333
    %v344 = vpack.c.b16 %v336, %v335
    %353 = vmatprep.subr.bf16.mxu0 0
    %354 = vmatpush1.bf16.msra.mxu0 %v337
    %355 = vmatprep.subr.bf16.mxu0 0
    %356 = vmatpush1.bf16.msra.mxu0 %v338
    %357 = vmatprep.subr.bf16.mxu0 0
    %358 = vmatpush1.bf16.msra.mxu0 %v339
    %359 = vmatprep.subr.bf16.mxu0 0
    %360 = vmatpush1.bf16.msra.mxu0 %v340
    %361 = vmatprep.subr.bf16.mxu0 0
    %362 = vmatpush1.bf16.msra.mxu0 %v341
    %363 = vmatprep.subr.bf16.mxu0 0
    %364 = vmatpush1.bf16.msra.mxu0 %v342
    %365 = vmatprep.subr.bf16.mxu0 0
    %366 = vmatpush1.bf16.msra.mxu0 %v343
    %367 = vmatprep.subr.bf16.mxu0 0
    %368 = vmatpush1.bf16.msra.mxu0 %v344
    %369 = vmatprep.subr.bf16.mxu0 0
    %370 = vmatpush1.bf16.msra.mxu0 0
    %371 = vmatprep.subr.bf16.mxu0 0
    %372 = vmatpush1.bf16.msra.mxu0 0
    %373 = vmatprep.subr.bf16.mxu0 0
    %374 = vmatpush1.bf16.msra.mxu0 0
    %375 = vmatprep.subr.bf16.mxu0 0
    %376 = vmatpush1.bf16.msra.mxu0 0
    %377 = vmatprep.subr.bf16.mxu0 0
    %378 = vmatpush1.bf16.msra.mxu0 0
    %379 = vmatprep.subr.bf16.mxu0 0
    %380 = vmatpush1.bf16.msra.mxu0 0
    %381 = vmatprep.subr.bf16.mxu0 0
    %382 = vmatpush1.bf16.msra.mxu0 0
    %383 = vmatprep.subr.bf16.mxu0 0
    %384 = vmatpush1.bf16.msra.mxu0 0
    %385 = vmatprep.mubr.bf16.mxu0 0
    %386 = vmatmul.mubr.bf16.gmra.mrb[0].mxu0 %v278
    %v387 = vpop.f32.mrb[0].mxu0
    %v388 = vadd.f32 %v303, %v387
    %v389 = vpop.f32.mrb[0].mxu0
    %v390 = vpop.f32.mrb[0].mxu0
    %v391 = vadd.f32 %v303, %v390
    %v392 = vpop.f32.mrb[0].mxu0
    %393 = vmatprep.mubr.bf16.mxu0 0
    %394 = vmatmul.mubr.bf16.gmra.mrb[0].mxu0 %v279
    %v395 = vpop.f32.mrb[0].mxu0
    %v396 = vadd.f32 %v303, %v395
    %v397 = vpop.f32.mrb[0].mxu0
    %v398 = vpop.f32.mrb[0].mxu0
    %v399 = vadd.f32 %v303, %v398
    %v400 = vpop.f32.mrb[0].mxu0
    %401 = vmatprep.mubr.bf16.mxu0 0
    %402 = vmatmul.mubr.bf16.gmra.mrb[0].mxu0 %v280
    %v403 = vpop.f32.mrb[0].mxu0
    %v404 = vadd.f32 %v303, %v403
    %v405 = vpop.f32.mrb[0].mxu0
    %v406 = vpop.f32.mrb[0].mxu0
    %v407 = vadd.f32 %v303, %v406
    %v408 = vpop.f32.mrb[0].mxu0
    %409 = vmatprep.mubr.bf16.mxu0 0
    %410 = vmatmul.mubr.bf16.gmra.mrb[0].mxu0 %v281
    %v411 = vpop.f32.mrb[0].mxu0
    %v412 = vadd.f32 %v303, %v411
    %v413 = vpop.f32.mrb[0].mxu0
    %v414 = vpop.f32.mrb[0].mxu0
    %v415 = vadd.f32 %v303, %v414
    %v416 = vpop.f32.mrb[0].mxu0
    %417 = vdwg.mxu0
    %v418 = vmax.f32 %v388, 0.0
    %v419 = vmax.f32 %v391, 0.0
    %v420 = vmax.f32 %v396, 0.0
    %v421 = vmax.f32 %v399, 0.0
    %v422 = vmax.f32 %v404, 0.0
    %v423 = vmax.f32 %v407, 0.0
    %v424 = vmax.f32 %v412, 0.0
    %v425 = vmax.f32 %v415, 0.0
    %v426 = vpack.c.bf16 %v419, %v418
    %v427 = vpack.c.bf16 %v421, %v420
    %v428 = vpack.c.bf16 %v423, %v422
    %v429 = vpack.c.bf16 %v425, %v424
    %v430 = vld [vmem:[#allocation8] sm:$0xf]
    %v431 = vld [vmem:[#allocation8 + $0x4] sm:$0xf]
    %v432 = vld [vmem:[#allocation8 + $0x8] sm:$0xf]
    %v433 = vld [vmem:[#allocation8 + $0xc] sm:$0xf]
    %v434 = vld [vmem:[#allocation8 + $0x10] sm:$0xf]
    %v435 = vld [vmem:[#allocation8 + $0x14] sm:$0xf]
    %v436 = vld [vmem:[#allocation8 + $0x18] sm:$0xf]
    %v437 = vld [vmem:[#allocation8 + $0x1c] sm:$0xf]
    %v438 = vld [vmem:[#allocation8 + $0x20] sm:$0xf]
    %v439 = vld [vmem:[#allocation8 + $0x24] sm:$0xf]
    %v440 = vld [vmem:[#allocation8 + $0x28] sm:$0xf]
    %v441 = vld [vmem:[#allocation8 + $0x2c] sm:$0xf]
    %v442 = vld [vmem:[#allocation8 + $0x30] sm:$0xf]
    %v443 = vld [vmem:[#allocation8 + $0x34] sm:$0xf]
    %v444 = vld [vmem:[#allocation8 + $0x38] sm:$0xf]
    %v445 = vld [vmem:[#allocation8 + $0x3c] sm:$0xf]
    %v446 = vld [vmem:[%s6] sm:$0x1]
    %v448 = vlaneseq
    %v449 = vshrl.u32 %v448, 7
    %v450 = vsub.s32 0, %v449
    %v451 = vrot.slane %v446, %v450
    %v469 = vunpack.c.l.b16 %v430
    %v470 = vunpack.c.l.b16 %v431
    %v471 = vunpack.c.l.b16 %v432
    %v472 = vunpack.c.l.b16 %v433
    %v473 = vunpack.c.l.b16 %v434
    %v474 = vunpack.c.l.b16 %v435
    %v475 = vunpack.c.l.b16 %v436
    %v476 = vunpack.c.l.b16 %v437
    %v477 = vunpack.c.l.b16 %v438
    %v478 = vunpack.c.l.b16 %v439
    %v479 = vunpack.c.l.b16 %v440
    %v480 = vunpack.c.l.b16 %v441
    %v481 = vunpack.c.l.b16 %v442
    %v482 = vunpack.c.l.b16 %v443
    %v483 = vunpack.c.l.b16 %v444
    %v484 = vunpack.c.l.b16 %v445
    %v485 = vpack.c.b16 %v470, %v469
    %v486 = vpack.c.b16 %v472, %v471
    %v487 = vpack.c.b16 %v474, %v473
    %v488 = vpack.c.b16 %v476, %v475
    %v489 = vpack.c.b16 %v478, %v477
    %v490 = vpack.c.b16 %v480, %v479
    %v491 = vpack.c.b16 %v482, %v481
    %v492 = vpack.c.b16 %v484, %v483
    %501 = vmatprep.subr.bf16.mxu0 0
    %502 = vmatpush1.bf16.msra.mxu0 %v485
    %503 = vmatprep.subr.bf16.mxu0 0
    %504 = vmatpush1.bf16.msra.mxu0 %v486
    %505 = vmatprep.subr.bf16.mxu0 0
    %506 = vmatpush1.bf16.msra.mxu0 %v487
    %507 = vmatprep.subr.bf16.mxu0 0
    %508 = vmatpush1.bf16.msra.mxu0 %v488
    %509 = vmatprep.subr.bf16.mxu0 0
    %510 = vmatpush1.bf16.msra.mxu0 %v489
    %511 = vmatprep.subr.bf16.mxu0 0
    %512 = vmatpush1.bf16.msra.mxu0 %v490
    %513 = vmatprep.subr.bf16.mxu0 0
    %514 = vmatpush1.bf16.msra.mxu0 %v491
    %515 = vmatprep.subr.bf16.mxu0 0
    %516 = vmatpush1.bf16.msra.mxu0 %v492
    %517 = vmatprep.subr.bf16.mxu0 0
    %518 = vmatpush1.bf16.msra.mxu0 0
    %519 = vmatprep.subr.bf16.mxu0 0
    %520 = vmatpush1.bf16.msra.mxu0 0
    %521 = vmatprep.subr.bf16.mxu0 0
    %522 = vmatpush1.bf16.msra.mxu0 0
    %523 = vmatprep.subr.bf16.mxu0 0
    %524 = vmatpush1.bf16.msra.mxu0 0
    %525 = vmatprep.subr.bf16.mxu0 0
    %526 = vmatpush1.bf16.msra.mxu0 0
    %527 = vmatprep.subr.bf16.mxu0 0
    %528 = vmatpush1.bf16.msra.mxu0 0
    %529 = vmatprep.subr.bf16.mxu0 0
    %530 = vmatpush1.bf16.msra.mxu0 0
    %531 = vmatprep.subr.bf16.mxu0 0
    %532 = vmatpush1.bf16.msra.mxu0 0
    %533 = vmatprep.mubr.bf16.mxu0 0
    %534 = vmatmul.mubr.bf16.gmra.mrb[0].mxu0 %v426
    %v535 = vpop.f32.mrb[0].mxu0
    %v536 = vadd.f32 %v451, %v535
    %v537 = vpop.f32.mrb[0].mxu0
    %v538 = vpop.f32.mrb[0].mxu0
    %v539 = vadd.f32 %v451, %v538
    %v540 = vpop.f32.mrb[0].mxu0
    %541 = vmatprep.mubr.bf16.mxu0 0
    %542 = vmatmul.mubr.bf16.gmra.mrb[0].mxu0 %v427
    %v543 = vpop.f32.mrb[0].mxu0
    %v544 = vadd.f32 %v451, %v543
    %v545 = vpop.f32.mrb[0].mxu0
    %v546 = vpop.f32.mrb[0].mxu0
    %v547 = vadd.f32 %v451, %v546
    %v548 = vpop.f32.mrb[0].mxu0
    %549 = vmatprep.mubr.bf16.mxu0 0
    %550 = vmatmul.mubr.bf16.gmra.mrb[0].mxu0 %v428
    %v551 = vpop.f32.mrb[0].mxu0
    %v552 = vadd.f32 %v451, %v551
    %v553 = vpop.f32.mrb[0].mxu0
    %v554 = vpop.f32.mrb[0].mxu0
    %v555 = vadd.f32 %v451, %v554
    %v556 = vpop.f32.mrb[0].mxu0
    %557 = vmatprep.mubr.bf16.mxu0 0
    %558 = vmatmul.mubr.bf16.gmra.mrb[0].mxu0 %v429
    %v559 = vpop.f32.mrb[0].mxu0
    %v560 = vadd.f32 %v451, %v559
    %v561 = vpop.f32.mrb[0].mxu0
    %v562 = vpop.f32.mrb[0].mxu0
    %v563 = vadd.f32 %v451, %v562
    %v564 = vpop.f32.mrb[0].mxu0
    %565 = vdwg.mxu0
    %v566 = vmax.f32 %v536, 0.0
    %v567 = vmax.f32 %v539, 0.0
    %v568 = vmax.f32 %v544, 0.0
    %v569 = vmax.f32 %v547, 0.0
    %v570 = vmax.f32 %v552, 0.0
    %v571 = vmax.f32 %v555, 0.0
    %v572 = vmax.f32 %v560, 0.0
    %v573 = vmax.f32 %v563, 0.0
    %v574 = vpack.c.bf16 %v567, %v566
    %v575 = vpack.c.bf16 %v569, %v568
    %v576 = vpack.c.bf16 %v571, %v570
    %v577 = vpack.c.bf16 %v573, %v572
    %v578 = vld [vmem:[#allocation10] sm:$0xf]
    %v579 = vld [vmem:[#allocation10 + $0x4] sm:$0xf]
    %v580 = vld [vmem:[#allocation10 + $0x8] sm:$0xf]
    %v581 = vld [vmem:[#allocation10 + $0xc] sm:$0xf]
    %v582 = vld [vmem:[#allocation10 + $0x10] sm:$0xf]
    %v583 = vld [vmem:[#allocation10 + $0x14] sm:$0xf]
    %v584 = vld [vmem:[#allocation10 + $0x18] sm:$0xf]
    %v585 = vld [vmem:[#allocation10 + $0x1c] sm:$0xf]
    %v586 = vld [vmem:[#allocation10 + $0x20] sm:$0xf]
    %v587 = vld [vmem:[#allocation10 + $0x24] sm:$0xf]
    %v588 = vld [vmem:[#allocation10 + $0x28] sm:$0xf]
    %v589 = vld [vmem:[#allocation10 + $0x2c] sm:$0xf]
    %v590 = vld [vmem:[#allocation10 + $0x30] sm:$0xf]
    %v591 = vld [vmem:[#allocation10 + $0x34] sm:$0xf]
    %v592 = vld [vmem:[#allocation10 + $0x38] sm:$0xf]
    %v593 = vld [vmem:[#allocation10 + $0x3c] sm:$0xf]
    %v594 = vld [vmem:[%s8] sm:$0x1]
    %v596 = vlaneseq
    %v597 = vshrl.u32 %v596, 7
    %v598 = vsub.s32 0, %v597
    %v599 = vrot.slane %v594, %v598
    %v617 = vunpack.c.l.b16 %v578
    %v618 = vunpack.c.l.b16 %v579
    %v619 = vunpack.c.l.b16 %v580
    %v620 = vunpack.c.l.b16 %v581
    %v621 = vunpack.c.l.b16 %v582
    %v622 = vunpack.c.l.b16 %v583
    %v623 = vunpack.c.l.b16 %v584
    %v624 = vunpack.c.l.b16 %v585
    %v625 = vunpack.c.l.b16 %v586
    %v626 = vunpack.c.l.b16 %v587
    %v627 = vunpack.c.l.b16 %v588
    %v628 = vunpack.c.l.b16 %v589
    %v629 = vunpack.c.l.b16 %v590
    %v630 = vunpack.c.l.b16 %v591
    %v631 = vunpack.c.l.b16 %v592
    %v632 = vunpack.c.l.b16 %v593
    %v633 = vpack.c.b16 %v618, %v617
    %v634 = vpack.c.b16 %v620, %v619
    %v635 = vpack.c.b16 %v622, %v621
    %v636 = vpack.c.b16 %v624, %v623
    %v637 = vpack.c.b16 %v626, %v625
    %v638 = vpack.c.b16 %v628, %v627
    %v639 = vpack.c.b16 %v630, %v629
    %v640 = vpack.c.b16 %v632, %v631
    %649 = vmatprep.subr.bf16.mxu0 0
    %650 = vmatpush1.bf16.msra.mxu0 %v633
    %651 = vmatprep.subr.bf16.mxu0 0
    %652 = vmatpush1.bf16.msra.mxu0 %v634
    %653 = vmatprep.subr.bf16.mxu0 0
    %654 = vmatpush1.bf16.msra.mxu0 %v635
    %655 = vmatprep.subr.bf16.mxu0 0
    %656 = vmatpush1.bf16.msra.mxu0 %v636
    %657 = vmatprep.subr.bf16.mxu0 0
    %658 = vmatpush1.bf16.msra.mxu0 %v637
    %659 = vmatprep.subr.bf16.mxu0 0
    %660 = vmatpush1.bf16.msra.mxu0 %v638
    %661 = vmatprep.subr.bf16.mxu0 0
    %662 = vmatpush1.bf16.msra.mxu0 %v639
    %663 = vmatprep.subr.bf16.mxu0 0
    %664 = vmatpush1.bf16.msra.mxu0 %v640
    %665 = vmatprep.subr.bf16.mxu0 0
    %666 = vmatpush1.bf16.msra.mxu0 0
    %667 = vmatprep.subr.bf16.mxu0 0
    %668 = vmatpush1.bf16.msra.mxu0 0
    %669 = vmatprep.subr.bf16.mxu0 0
    %670 = vmatpush1.bf16.msra.mxu0 0
    %671 = vmatprep.subr.bf16.mxu0 0
    %672 = vmatpush1.bf16.msra.mxu0 0
    %673 = vmatprep.subr.bf16.mxu0 0
    %674 = vmatpush1.bf16.msra.mxu0 0
    %675 = vmatprep.subr.bf16.mxu0 0
    %676 = vmatpush1.bf16.msra.mxu0 0
    %677 = vmatprep.subr.bf16.mxu0 0
    %678 = vmatpush1.bf16.msra.mxu0 0
    %679 = vmatprep.subr.bf16.mxu0 0
    %680 = vmatpush1.bf16.msra.mxu0 0
    %681 = vmatprep.mubr.bf16.mxu0 0
    %682 = vmatmul.mubr.bf16.gmra.mrb[0].mxu0 %v574
    %v683 = vpop.f32.mrb[0].mxu0
    %v684 = vadd.f32 %v599, %v683
    %v685 = vpop.f32.mrb[0].mxu0
    %v686 = vpop.f32.mrb[0].mxu0
    %v687 = vadd.f32 %v599, %v686
    %v688 = vpop.f32.mrb[0].mxu0
    %689 = vmatprep.mubr.bf16.mxu0 0
    %690 = vmatmul.mubr.bf16.gmra.mrb[0].mxu0 %v575
    %v691 = vpop.f32.mrb[0].mxu0
    %v692 = vadd.f32 %v599, %v691
    %v693 = vpop.f32.mrb[0].mxu0
    %v694 = vpop.f32.mrb[0].mxu0
    %v695 = vadd.f32 %v599, %v694
    %v696 = vpop.f32.mrb[0].mxu0
    %697 = vmatprep.mubr.bf16.mxu0 0
    %698 = vmatmul.mubr.bf16.gmra.mrb[0].mxu0 %v576
    %v699 = vpop.f32.mrb[0].mxu0
    %v700 = vadd.f32 %v599, %v699
    %v701 = vpop.f32.mrb[0].mxu0
    %v702 = vpop.f32.mrb[0].mxu0
    %v703 = vadd.f32 %v599, %v702
    %v704 = vpop.f32.mrb[0].mxu0
    %705 = vmatprep.mubr.bf16.mxu0 0
    %706 = vmatmul.mubr.bf16.gmra.mrb[0].mxu0 %v577
    %v707 = vpop.f32.mrb[0].mxu0
    %v708 = vadd.f32 %v599, %v707
    %v709 = vpop.f32.mrb[0].mxu0
    %v710 = vpop.f32.mrb[0].mxu0
    %v711 = vadd.f32 %v599, %v710
    %v712 = vpop.f32.mrb[0].mxu0
    %713 = vdwg.mxu0
    %714 = vst [vmem:[#allocation11] sm:$0xff] %v684
    %715 = vst [vmem:[#allocation11 + $0x8] sm:$0xff] %v687
    %716 = vst [vmem:[#allocation11 + $0x10] sm:$0xff] %v692
    %717 = vst [vmem:[#allocation11 + $0x18] sm:$0xff] %v695
    %718 = vst [vmem:[#allocation11 + $0x20] sm:$0xff] %v700
    %719 = vst [vmem:[#allocation11 + $0x28] sm:$0xff] %v703
    %720 = vst [vmem:[#allocation11 + $0x30] sm:$0xff] %v708
    %721 = vst [vmem:[#allocation11 + $0x38] sm:$0xff] %v711
    // Predicated region
    $region58: #{tpu_custom_call.1} parent=1 // pred_check
      _
    $region59: #{tpu_custom_call.1} parent=1 // pred_check_branch
      %723 = sbr.rel (0) target = $region61
    $region60: #{tpu_custom_call.1} parent=1 // pred_region
      %s725 = ssub.s32 1024, 1024
      %726 = vsyncadd [#allocation4], %s725
      %s727 = sshll.u32 [#allocation11], 4
      %s728 = int_to_ptr.vmem [resolvable:$true] %s727
      %733 = dma.vmem_to_hbm [thread:$0]  %s728, 1024, %s9, [#allocation4], 128, 128, 8
    $region61: #{tpu_custom_call.1} parent=1 // pred_fallthru
      _
    // Predicated region
    $region62: #{tpu_custom_call.1} parent=1 // pred_check
      _
    $region63: #{tpu_custom_call.1} parent=1 // pred_check_branch
      %735 = sbr.rel (0) target = $region65
    $region64: #{tpu_custom_call.1} parent=1 // pred_region
      %736 = dma.done [#allocation4], 1024
    $region65: #{tpu_custom_call.1} parent=1 // pred_fallthru
      _
    %737 = vsyncpa [#allocation3], 1
    %738 = vsyncpa [#allocation6], 1
    %739 = vsyncpa [#allocation9], 1
    %740 = vsyncpa [#allocation4], 1

</llo_original>
